<compile_context>
chip_gen: v7x
topology: tpu7x:2x2x1
jax: 0.10.0
libtpu: 0.0.40
codegen_flags: <defaults>
</compile_context>

<pallas_src>
import functools

import jax
import jax.numpy as jnp
from jax.experimental import pallas as pl
from jax.experimental.pallas import tpu as pltpu


def _kd_kernel(s_ref, t_ref, o_ref, *, inv_temperature: float, batch: int,
               tile_rows: int):
    inv_T = jnp.float32(inv_temperature)

    s = s_ref[...].astype(jnp.float32) * inv_T        # (TB, C) student logits / T
    t = t_ref[...].astype(jnp.float32) * inv_T        # (TB, C) teacher logits / T

    # Shift by per-row max for numerical stability (softmax-invariant).
    s = s - jnp.max(s, axis=1, keepdims=True)
    t = t - jnp.max(t, axis=1, keepdims=True)

    z_s = jnp.sum(jnp.exp(s), axis=1, keepdims=True)  # student partition fn (TB,1)
    exp_t = jnp.exp(t)
    z_t = jnp.sum(exp_t, axis=1, keepdims=True)       # teacher partition fn (TB,1)

    # Folded KL(p_t || p_s) per row:
    #   sum_j p_t * (log p_t - log p_s)
    # = (1/z_t) * sum_j exp_t * (t - s) + log z_s - log z_t
    # -> no log_p_s / log_p_t tiles, one exact per-row divide.
    num = jnp.sum(exp_t * (t - s), axis=1, keepdims=True)
    row_kl = num / z_t + jnp.log(z_s) - jnp.log(z_t)   # (TB, 1)

    # Mask rows beyond the true batch (ragged last tile reads undefined data;
    # the select zeroes any garbage/NaN contribution).
    row_ids = pl.program_id(0) * tile_rows + jax.lax.broadcasted_iota(
        jnp.int32, row_kl.shape, 0)
    row_kl = jnp.where(row_ids < batch, row_kl, 0.0)

    partial = jnp.sum(row_kl)

    # Replicate this tile's partial sum across a lane-dense (8, 128) block so
    # the store is an unmasked vst and grid steps stay independent ("parallel").
    o_ref[...] = jnp.full(o_ref.shape, partial, dtype=jnp.float32)


def _round_up(x: int, m: int) -> int:
    return ((x + m - 1) // m) * m


def knowledge_distillation_loss(out_s: jax.Array, out_t: jax.Array, T: float) -> jax.Array:
    """Pallas TPU implementation of KnowlegeDistilation(T).forward(out_s, out_t)."""
    assert out_s.shape == out_t.shape and out_s.ndim == 2
    B, C = out_s.shape
    itemsize = jnp.dtype(out_s.dtype).itemsize

    # Per-row working bytes: 2 inputs x 2 pipeline buffers in the input dtype
    # plus ~3 f32 (TB, C) elementwise temporaries inside the kernel.
    bytes_per_row = 2 * 2 * C * itemsize + 3 * C * 4
    block_budget = 30 * 1024 * 1024                    # working budget per grid step

    tb = block_budget // max(bytes_per_row, 1)
    tb = min(tb, 4096)                                  # row cap (big tiles on v5e/v6e)
    tb = min(tb, _round_up(-(-B // 2), 8))              # >= 2 tiles when B allows (v7x megacore)
    tb = max(8, (tb // 8) * 8)                          # sublane multiple, floor 8
    tb = min(tb, _round_up(B, 8))

    num_tiles = -(-B // tb)

    # VMEM limit derived from the actual footprint + margin; <= 40 MiB so it is
    # comfortably inside v7x's 64 MiB physical VMEM.
    vmem_limit = bytes_per_row * tb + (4 << 20)
    vmem_limit = max(16 << 20, min(vmem_limit, 40 << 20))

    kernel = functools.partial(
        _kd_kernel, inv_temperature=1.0 / float(T), batch=B, tile_rows=tb)

    cost = pl.CostEstimate(
        flops=8 * B * C,
        transcendentals=2 * B * C + 2 * B,
        bytes_accessed=2 * B * C * itemsize + num_tiles * 8 * 128 * 4,
    )

    partials = pl.pallas_call(
        kernel,
        out_shape=jax.ShapeDtypeStruct((num_tiles, 8, 128), jnp.float32),
        grid=(num_tiles,),
        in_specs=[
            pl.BlockSpec((tb, C), lambda i: (i, 0)),
            pl.BlockSpec((tb, C), lambda i: (i, 0)),
        ],
        out_specs=pl.BlockSpec((1, 8, 128), lambda i: (i, 0, 0)),
        compiler_params=pltpu.CompilerParams(
            dimension_semantics=("parallel",),
            vmem_limit_bytes=int(vmem_limit),
        ),
        cost_estimate=cost,
    )(out_s, out_t)

    # 'batchmean' over the ORIGINAL batch size, then * T^2 (done on host side;
    # it is O(num_tiles) work).
    return jnp.sum(partials[:, 0, 0]) * (float(T) * float(T) / B)


def _reference(out_s, out_t, T):
    """Pure-JAX reference matching F.kl_div(..., reduction='batchmean') * T * T."""
    log_p_s = jax.nn.log_softmax(out_s.astype(jnp.float32) / T, axis=1)
    p_t = jax.nn.softmax(out_t.astype(jnp.float32) / T, axis=1)
    log_p_t = jax.nn.log_softmax(out_t.astype(jnp.float32) / T, axis=1)
    kl = jnp.where(p_t > 0, p_t * (log_p_t - log_p_s), 0.0)
    return jnp.sum(kl) / out_s.shape[0] * T * T


if __name__ == "__main__":
    key = jax.random.PRNGKey(0)
    k1, k2 = jax.random.split(key)

    B, C = 8, 128          # batch x num_classes (small test shape)
    T = 2.0                # distillation temperature

    out_s = jax.random.normal(k1, (B, C), dtype=jnp.float32) * 3.0
    out_t = jax.random.normal(k2, (B, C), dtype=jnp.float32) * 3.0

    loss = knowledge_distillation_loss(out_s, out_t, T)
    jax.block_until_ready(loss)

    ref = _reference(out_s, out_t, T)
    # Exact per-row reciprocal -> f32-level agreement with the pure-JAX reference.
    assert jnp.allclose(loss, ref, rtol=1e-4, atol=1e-5), (loss, ref)

    print("KERNEL_OK")
</pallas_src>

<mosaic_0001>
module attributes {stable_mosaic.version = 11 : i64} {
  func.func @_kd_kernel(%arg0: i32, %arg1: memref<8x128xf32, #tpu.memory_space<vmem>>, %arg2: memref<8x128xf32, #tpu.memory_space<vmem>>, %arg3: memref<1x8x128xf32, #tpu.memory_space<vmem>>) attributes {dimension_semantics = [#tpu.dimension_semantics<parallel>], iteration_bounds = array<i64: 1>, scalar_prefetch = 0 : i64, scratch_operands = 0 : i64, tpu.core_type = #tpu.core_type<tc>, window_params = [{transform_indices = @transform_0, window_bounds = array<i64: 8, 128>}, {transform_indices = @transform_1, window_bounds = array<i64: 8, 128>}, {transform_indices = @transform_2, window_bounds = array<i64: 1, 8, 128>}]} {
    %c0 = arith.constant 0 : index
    %c0_0 = arith.constant 0 : index
    %0 = vector.load %arg1[%c0, %c0_0] : memref<8x128xf32, #tpu.memory_space<vmem>>, vector<8x128xf32>
    %cst = arith.constant 5.000000e-01 : f32
    %1 = vector.broadcast %cst : f32 to vector<8x128xf32>
    %2 = arith.mulf %0, %1 : vector<8x128xf32>
    %c0_1 = arith.constant 0 : index
    %c0_2 = arith.constant 0 : index
    %3 = vector.load %arg2[%c0_1, %c0_2] : memref<8x128xf32, #tpu.memory_space<vmem>>, vector<8x128xf32>
    %cst_3 = arith.constant 5.000000e-01 : f32
    %4 = vector.broadcast %cst_3 : f32 to vector<8x128xf32>
    %5 = arith.mulf %3, %4 : vector<8x128xf32>
    %cst_4 = arith.constant dense<0xFF800000> : vector<8xf32>
    %6 = vector.multi_reduction <maximumf>, %2, %cst_4 [1] : vector<8x128xf32> to vector<8xf32>
    %7 = vector.shape_cast %6 : vector<8xf32> to vector<8x1xf32>
    %8 = vector.broadcast %7 : vector<8x1xf32> to vector<8x128xf32>
    %9 = arith.subf %2, %8 : vector<8x128xf32>
    %cst_5 = arith.constant dense<0xFF800000> : vector<8xf32>
    %10 = vector.multi_reduction <maximumf>, %5, %cst_5 [1] : vector<8x128xf32> to vector<8xf32>
    %11 = vector.shape_cast %10 : vector<8xf32> to vector<8x1xf32>
    %12 = vector.broadcast %11 : vector<8x1xf32> to vector<8x128xf32>
    %13 = arith.subf %5, %12 : vector<8x128xf32>
    %14 = math.exp %9 : vector<8x128xf32>
    %cst_6 = arith.constant dense<0.000000e+00> : vector<8xf32>
    %15 = vector.multi_reduction <add>, %14, %cst_6 [1] : vector<8x128xf32> to vector<8xf32>
    %16 = vector.shape_cast %15 : vector<8xf32> to vector<8x1xf32>
    %17 = math.exp %13 : vector<8x128xf32>
    %cst_7 = arith.constant dense<0.000000e+00> : vector<8xf32>
    %18 = vector.multi_reduction <add>, %17, %cst_7 [1] : vector<8x128xf32> to vector<8xf32>
    %19 = vector.shape_cast %18 : vector<8xf32> to vector<8x1xf32>
    %20 = arith.subf %13, %9 : vector<8x128xf32>
    %21 = arith.mulf %17, %20 : vector<8x128xf32>
    %cst_8 = arith.constant dense<0.000000e+00> : vector<8xf32>
    %22 = vector.multi_reduction <add>, %21, %cst_8 [1] : vector<8x128xf32> to vector<8xf32>
    %23 = vector.shape_cast %22 : vector<8xf32> to vector<8x1xf32>
    %24 = arith.divf %23, %19 : vector<8x1xf32>
    %25 = math.log %16 : vector<8x1xf32>
    %26 = arith.addf %24, %25 : vector<8x1xf32>
    %27 = math.log %19 : vector<8x1xf32>
    %28 = arith.subf %26, %27 : vector<8x1xf32>
    %c8_i32 = arith.constant 8 : i32
    %29 = arith.muli %arg0, %c8_i32 : i32
    %30 = tpu.iota {dimensions = array<i32: 0>} : vector<8x1xi32>
    %31 = vector.broadcast %29 : i32 to vector<8x1xi32>
    %32 = arith.addi %31, %30 : vector<8x1xi32>
    %c8_i32_9 = arith.constant 8 : i32
    %33 = vector.broadcast %c8_i32_9 : i32 to vector<8x1xi32>
    %34 = arith.cmpi slt, %32, %33 : vector<8x1xi32>
    %cst_10 = arith.constant 0.000000e+00 : f32
    %35 = vector.broadcast %cst_10 : f32 to vector<8x1xf32>
    %36 = arith.select %34, %28, %35 : vector<8x1xi1>, vector<8x1xf32>
    %37 = vector.shape_cast %36 : vector<8x1xf32> to vector<1x8x1xf32>
    %cst_11 = arith.constant dense<0.000000e+00> : vector<1xf32>
    %38 = vector.multi_reduction <add>, %37, %cst_11 [1, 2] : vector<1x8x1xf32> to vector<1xf32>
    %39 = vector.shape_cast %38 : vector<1xf32> to vector<1x1x1xf32>
    %40 = vector.extract %39[0, 0, 0] : f32 from vector<1x1x1xf32>
    %41 = vector.broadcast %40 : f32 to vector<1x8x128xf32>
    %c0_12 = arith.constant 0 : index
    %c0_13 = arith.constant 0 : index
    %c0_14 = arith.constant 0 : index
    %42 = vector.load %arg3[%c0_12, %c0_13, %c0_14] : memref<1x8x128xf32, #tpu.memory_space<vmem>>, vector<1x8x128xf32>
    tpu.vector_store %arg3[%c0_12, %c0_13, %c0_14], %41 {strides = array<i32>} : memref<1x8x128xf32, #tpu.memory_space<vmem>>, vector<1x8x128xf32>,
    return
  }
  func.func @transform_0(%arg0: i32) -> (i32, i32) {
    %c0_i32 = arith.constant 0 : i32
    %c0_i32_0 = arith.constant 0 : i32
    return %arg0, %c0_i32 : i32, i32
  }
  func.func @transform_1(%arg0: i32) -> (i32, i32) {
    %c0_i32 = arith.constant 0 : i32
    %c0_i32_0 = arith.constant 0 : i32
    return %arg0, %c0_i32 : i32, i32
  }
  func.func @transform_2(%arg0: i32) -> (i32, i32, i32) {
    %c0_i32 = arith.constant 0 : i32
    %c0_i32_0 = arith.constant 0 : i32
    %c0_i32_1 = arith.constant 0 : i32
    return %arg0, %c0_i32, %c0_i32_0 : i32, i32, i32
  }
}

</mosaic_0001>

<llo_original>
// kernel: tpu_custom_call.1
$region0: #{tpu_custom_call.1}
  #allocation0 [shape = 'u32[]', space=smem, size = 0x4, offset = 0x4, fixed_abs, tag = 'smem constant byte address 0x4 - core index']
  #allocation1 [shape = 'u32[144,128]{1,0:T(1,128)}', space=vmem, size = 0x12000, scoped, tag = 'internal scratch']
  %s0 = inlined_call_operand.hbm [shape: f32[8,128], index: 0, kind: input, shape index: {}]
  %s1 = inlined_call_operand.hbm [shape: f32[8,128], index: 1, kind: input, shape index: {}]
  %s2 = inlined_call_operand.hbm [shape: f32[1,8,128], index: 2, kind: output, shape index: {}]
  %s3 = sld [smem:[#allocation0]]
  $region26: #{tpu_custom_call.1} parent=0
    _
  %s5 = ssub.s32 1, %s3
  %s6 = scalar_select 0, %s5, %s3
  $region1: #{tpu_custom_call.1} parent=0
    #allocation2 [shape = 'u8[4096]{0}', space=vmem, size = 0x1000, scoped, tag = 'input window, operand 0, single buffered']
    #allocation3 [shape = 's32[1]{0}', space=sflag, size = 0x4, scoped, tag = 'scoped memory for tpu_custom_call.1']
    #allocation4 [shape = 's32[1]{0}', space=sflag, size = 0x4, scoped, tag = 'scoped memory for tpu_custom_call.1']
    #allocation5 [shape = 'u8[4096]{0}', space=vmem, size = 0x1000, scoped, tag = 'input window, operand 1, single buffered']
    #allocation6 [shape = 's32[1]{0}', space=sflag, size = 0x4, scoped, tag = 'scoped memory for tpu_custom_call.1']
    #allocation7 [shape = 'u8[4096]{0}', space=vmem, size = 0x1000, scoped, tag = 'output window, operand 0, single buffered']
    %7 = vsyncpa [#allocation3], 0
    %8 = vsyncpa [#allocation6], 0
    %9 = vsyncpa [#allocation4], 0
    // Predicated region
    $region2: #{tpu_custom_call.1} parent=1 // pred_check
      _
    $region3: #{tpu_custom_call.1} parent=1 // pred_check_branch
      %11 = sbr.rel (0) target = $region5
    $region4: #{tpu_custom_call.1} parent=1 // pred_region
      %s13 = ssub.s32 128, 128
      %14 = vsyncadd [#allocation3], %s13
      %s16 = sshll.u32 [#allocation2], 4
      %s17 = int_to_ptr.vmem [resolvable:$true] %s16
      %19 = dma.hbm_to_vmem [thread:$0]  %s0, 128, %s17, [#allocation3]
    $region5: #{tpu_custom_call.1} parent=1 // pred_fallthru
      _
    // Predicated region
    $region6: #{tpu_custom_call.1} parent=1 // pred_check
      _
    $region7: #{tpu_custom_call.1} parent=1 // pred_check_branch
      %21 = sbr.rel (0) target = $region9
    $region8: #{tpu_custom_call.1} parent=1 // pred_region
      %s23 = ssub.s32 128, 128
      %24 = vsyncadd [#allocation6], %s23
      %s26 = sshll.u32 [#allocation5], 4
      %s27 = int_to_ptr.vmem [resolvable:$true] %s26
      %29 = dma.hbm_to_vmem [thread:$0]  %s1, 128, %s27, [#allocation6]
    $region9: #{tpu_custom_call.1} parent=1 // pred_fallthru
      _
    // Predicated region
    $region10: #{tpu_custom_call.1} parent=1 // pred_check
      _
    $region11: #{tpu_custom_call.1} parent=1 // pred_check_branch
      %31 = sbr.rel (0) target = $region13
    $region12: #{tpu_custom_call.1} parent=1 // pred_region
      %32 = dma.done [#allocation3], 128
    $region13: #{tpu_custom_call.1} parent=1 // pred_fallthru
      _
    // Predicated region
    $region14: #{tpu_custom_call.1} parent=1 // pred_check
      _
    $region15: #{tpu_custom_call.1} parent=1 // pred_check_branch
      %34 = sbr.rel (0) target = $region17
    $region16: #{tpu_custom_call.1} parent=1 // pred_region
      %35 = dma.done [#allocation6], 128
    $region17: #{tpu_custom_call.1} parent=1 // pred_fallthru
      _
    %v36 = vld [vmem:[#allocation2] sm:$0xff]
    %v37 = vmul.f32 %v36, 0.5
    %v38 = vld [vmem:[#allocation5] sm:$0xff]
    %v39 = vmul.f32 %v38, 0.5
    %40 = vmax.xlane.f32.xlu0 %v37
    %v41 = vpop.xlane.xlu0 %40
    %v42 = vsub.f32 %v37, %v41
    %43 = vmax.xlane.f32.xlu0 %v39
    %v44 = vpop.xlane.xlu0 %43
    %v45 = vsub.f32 %v39, %v44
    %v46 = vmul.f32 %v42, 1.442695
    %v47 = vpow.pop %v46
    %48 = vadd.xlane.f32.xlu0 %v47
    %v49 = vpop.xlane.xlu0 %48
    %v50 = vmul.f32 %v45, 1.442695
    %v51 = vpow.pop %v50
    %52 = vadd.xlane.f32.xlu0 %v51
    %v53 = vpop.xlane.xlu0 %52
    %v54 = vsub.f32 %v45, %v42
    %v55 = vmul.f32 %v51, %v54
    %56 = vadd.xlane.f32.xlu0 %v55
    %v57 = vpop.xlane.xlu0 %56
    %v58 = vrcp.pop %v53
    %v59 = vmul.f32 %v57, %v58
    %v60 = vlog2.pop %v49
    %v61 = vmul.f32 %v60, 0.6931472
    %v62 = vadd.f32 %v59, %v61
    %v63 = vlog2.pop %v53
    %v64 = vmul.f32 %v63, 0.6931472
    %v65 = vsub.f32 %v62, %v64
    %s66 = smul.u32 0, 8
    %v67 = vlaneseq
    %v68 = vshrl.u32 %v67, 7
    %v69 = vstv %s66
    %v70 = vadd.s32 %v69, %v68
    %vm71 = vcmp.lt.s32.totalorder %v70, 8
    %v72 = vsel %vm71, %v65, 0.0
    %vm73 = vcmask 7168
    %v74 = vsel %vm73, %v72, 0.0
    %75 = vadd.xlane.f32.xlu0 %v74
    %v76 = vpop.xlane.xlu0 %75
    %v77 = vrot.slane %v76, 4
    %v78 = vadd.f32 %v76, %v77
    %v79 = vrot.slane %v78, 2
    %v80 = vadd.f32 %v78, %v79
    %v81 = vrot.slane %v80, 1
    %v82 = vadd.f32 %v80, %v81
    %s83 = vtos %v82
    %v84 = vstv %s83
    %85 = vst [vmem:[#allocation7] sm:$0xff] %v84
    // Predicated region
    $region18: #{tpu_custom_call.1} parent=1 // pred_check
      _
    $region19: #{tpu_custom_call.1} parent=1 // pred_check_branch
      %87 = sbr.rel (0) target = $region21
    $region20: #{tpu_custom_call.1} parent=1 // pred_region
      %s89 = ssub.s32 128, 128
      %90 = vsyncadd [#allocation4], %s89
      %s92 = sshll.u32 [#allocation7], 4
      %s93 = int_to_ptr.vmem [resolvable:$true] %s92
      %95 = dma.vmem_to_hbm [thread:$0]  %s93, 128, %s2, [#allocation4]
    $region21: #{tpu_custom_call.1} parent=1 // pred_fallthru
      _
    // Predicated region
    $region22: #{tpu_custom_call.1} parent=1 // pred_check
      _
    $region23: #{tpu_custom_call.1} parent=1 // pred_check_branch
      %97 = sbr.rel (0) target = $region25
    $region24: #{tpu_custom_call.1} parent=1 // pred_region
      %98 = dma.done [#allocation4], 128
    $region25: #{tpu_custom_call.1} parent=1 // pred_fallthru
      _
    %99 = vsyncpa [#allocation3], 1
    %100 = vsyncpa [#allocation6], 1
    %101 = vsyncpa [#allocation4], 1

</llo_original>
